<compile_context>
chip_gen: v7x
topology: tpu7x:2x2x1
jax: 0.10.0
libtpu: 0.0.40
codegen_flags: <defaults>
</compile_context>

<pallas_src>
import math

import jax
import jax.numpy as jnp
from jax.experimental import pallas as pl
from jax.experimental.pallas import tpu as pltpu


def _round_up(x, m):
    return ((x + m - 1) // m) * m


def _vmem_capacity_bytes():
    """Per-core VMEM capacity; conservative (v7x-sized) fallback on failure."""
    try:
        return int(pltpu.get_tpu_info().vmem_capacity_bytes)
    except Exception:
        return 64 * 1024 * 1024


def _choose_entity_chunk(E, H, itemsize=4,
                         single_budget=4 << 20, chunk_budget=8 << 20):
    """Pick the entity-chunk size te (te divides E) -> (te, num_chunks).

    te == E means one monolithic chunk whose lane extent equals the full
    flattened E*H (a full-extent block dim is always BlockSpec-legal, even if
    E*H % 128 != 0).  When chunking, te*H must be a multiple of 128 and the
    per-chunk block-diagonal weight (te*H x te) must fit a small VMEM budget.
    """
    if E * E * H * itemsize <= single_budget:
        return E, 1
    g = 128 // math.gcd(H, 128)            # smallest te with (te*H) % 128 == 0
    te_cap = max(int(math.isqrt(chunk_budget // (H * itemsize))), 1)
    best = None
    d = g
    limit = min(E, max(te_cap, g))
    while d <= limit:
        if E % d == 0:
            best = d
        d += g
    if best is None:
        # TODO(synk): E has no 128-aligned divisor; fall back to the monolithic
        # block-diagonal weight (only VMEM-heavy for very large, awkward E).
        return E, 1
    return best, E // best


def prepare_cell_to_entity_params(weight, bias):
    """One-time parameter prep (hoisted out of the forward path).

    weight: [E, H], bias: [E] -> (w_chunks [C, te*H, te], b_chunks [C, 1, te])
    with w_chunks[c, j*H + h, j'] = weight[c*te + j, h] * (j == j').
    """
    E, H = weight.shape
    te, num_chunks = _choose_entity_chunk(E, H, jnp.dtype(weight.dtype).itemsize)
    KH = te * H
    w = weight.reshape(num_chunks, te, H)
    eye = jnp.eye(te, dtype=weight.dtype)
    w_chunks = (w[:, :, :, None] * eye[:, None, :]).reshape(num_chunks, KH, te)
    b_chunks = bias.reshape(num_chunks, 1, te).astype(jnp.float32)
    return w_chunks, b_chunks


def cell_to_entity_kernel(x_ref, w_ref, b_ref, o_ref):
    # x_ref: (tm, te*H)  lane-dense row slab for this entity chunk
    # w_ref: (te*H, te)  block-diagonal per-entity-chunk weights (VMEM resident)
    # b_ref: (1, te)     bias for this chunk
    # o_ref: (tm, te)
    acc = jnp.dot(x_ref[...], w_ref[...], preferred_element_type=jnp.float32)
    o_ref[...] = (acc + b_ref[...]).astype(o_ref.dtype)


@jax.jit
def cell_to_entity(cell_states, w_chunks, b_chunks):
    """cell_states: [B, S, E, H]; prepared params -> [B, S, E]."""
    B, S, E, H = cell_states.shape
    num_chunks, KH, te = w_chunks.shape
    assert KH == te * H and num_chunks * te == E, (
        "prepared params do not match cell_states shape")
    M = B * S
    EH = E * H

    # Free (metadata-only) reshape to a lane-dense 2-D slab; NO padding copies.
    x = cell_states.reshape(M, EH)

    # --- generation-aware row tiling ---------------------------------------
    isx = jnp.dtype(cell_states.dtype).itemsize
    iso = isx
    budget = min((_vmem_capacity_bytes() * 3) // 4, 100 * 1024 * 1024)
    # Pallas double-buffers every blocked operand (weight/bias included).
    const_bytes = 2 * (KH * te + te) * 4
    per_row_bytes = 2 * (KH * isx + te * iso)
    tm_cap = max((budget - const_bytes - (1 << 20)) // per_row_bytes, 8)
    tm = min(2048, _round_up(M, 8), (tm_cap // 8) * 8)
    # Keep >= 2 row blocks so the parallel M axis shards over both v7x cores.
    tm = min(tm, _round_up(pl.cdiv(M, 2), 8))
    tm = max(tm, 8)
    grid_m = pl.cdiv(M, tm)   # ragged last row block is masked by Pallas

    out = pl.pallas_call(
        cell_to_entity_kernel,
        out_shape=jax.ShapeDtypeStruct((num_chunks, M, te), cell_states.dtype),
        grid_spec=pltpu.PrefetchScalarGridSpec(
            num_scalar_prefetch=0,
            # Entity-chunk axis outermost: weight/bias block index is constant
            # across the inner row sweep, so they are not re-fetched.
            grid=(num_chunks, grid_m),
            in_specs=[
                pl.BlockSpec((tm, KH), lambda c, i: (i, c)),
                pl.BlockSpec((None, KH, te), lambda c, i: (c, 0, 0)),
                pl.BlockSpec((None, 1, te), lambda c, i: (c, 0, 0)),
            ],
            out_specs=pl.BlockSpec((None, tm, te), lambda c, i: (c, i, 0)),
        ),
        compiler_params=pltpu.CompilerParams(
            dimension_semantics=("parallel", "parallel"),
            vmem_limit_bytes=int(budget),
        ),
    )(x, w_chunks, b_chunks)

    if num_chunks == 1:
        out2d = out[0]
    else:
        # Output traffic is ~1/H of input traffic; this transpose is noise.
        out2d = jnp.moveaxis(out, 0, 1).reshape(M, E)
    return out2d.reshape(B, S, E)


if __name__ == "__main__":
    # small shapes consistent with the module's forward
    batch, seq_len, entity_num, hidden_size = 2, 8, 4, 32

    key = jax.random.PRNGKey(0)
    k_x, k_w, k_b = jax.random.split(key, 3)

    cell_states = jax.random.normal(
        k_x, (batch, seq_len, entity_num, hidden_size), dtype=jnp.float32
    )

    # deterministic parameter init (PyTorch Linear-style uniform bound),
    # replicated across entities to mirror copy.deepcopy of one layer.
    bound = 1.0 / math.sqrt(hidden_size)
    w_single = jax.random.uniform(
        k_w, (1, hidden_size), minval=-bound, maxval=bound, dtype=jnp.float32
    )
    b_single = jax.random.uniform(
        k_b, (1,), minval=-bound, maxval=bound, dtype=jnp.float32
    )
    weight = jnp.tile(w_single, (entity_num, 1))   # (E, H)
    bias = jnp.tile(b_single, (entity_num,))       # (E,)

    # one-time parameter prep (hoisted out of the per-step forward path)
    w_chunks, b_chunks = prepare_cell_to_entity_params(weight, bias)

    out = cell_to_entity(cell_states, w_chunks, b_chunks)
    out = jax.block_until_ready(out)

    # reference check in plain JAX
    ref = jnp.einsum("bseh,eh->bse", cell_states, weight) + bias[None, None, :]
    assert out.shape == (batch, seq_len, entity_num)
    assert jnp.allclose(out, ref, atol=1e-5, rtol=1e-5)

    print("KERNEL_OK")
</pallas_src>

<mosaic_0001>
module attributes {stable_mosaic.version = 11 : i64} {
  func.func @cell_to_entity_kernel(%arg0: i32, %arg1: i32, %arg2: memref<8x128xf32, #tpu.memory_space<vmem>>, %arg3: memref<1x128x4xf32, #tpu.memory_space<vmem>>, %arg4: memref<1x1x4xf32, #tpu.memory_space<vmem>>, %arg5: memref<1x8x4xf32, #tpu.memory_space<vmem>>) attributes {dimension_semantics = [#tpu.dimension_semantics<parallel>, #tpu.dimension_semantics<parallel>], iteration_bounds = array<i64: 1, 2>, scalar_prefetch = 0 : i64, scratch_operands = 0 : i64, tpu.core_type = #tpu.core_type<tc>, window_params = [{transform_indices = @transform_0, window_bounds = array<i64: 8, 128>}, {transform_indices = @transform_1, window_bounds = array<i64: 1, 128, 4>}, {transform_indices = @transform_2, window_bounds = array<i64: 1, 1, 4>}, {transform_indices = @transform_3, window_bounds = array<i64: 1, 8, 4>}]} {
    %c0 = arith.constant 0 : index
    %c0_0 = arith.constant 0 : index
    %0 = vector.load %arg2[%c0, %c0_0] : memref<8x128xf32, #tpu.memory_space<vmem>>, vector<8x128xf32>
    %c0_1 = arith.constant 0 : index
    %c0_2 = arith.constant 0 : index
    %c0_3 = arith.constant 0 : index
    %1 = vector.load %arg3[%c0_1, %c0_2, %c0_3] : memref<1x128x4xf32, #tpu.memory_space<vmem>>, vector<1x128x4xf32>
    %2 = vector.shape_cast %1 : vector<1x128x4xf32> to vector<128x4xf32>
    %cst = arith.constant dense<0.000000e+00> : vector<8x4xf32>
    %3 = tpu.matmul %0, %2, %cst {dimension_numbers = #tpu.dot_dimension_numbers<[1], [0], [0], [1], [0, 0, 1, 1], [], []>} : vector<8x128xf32>, vector<128x4xf32>, vector<8x4xf32> -> vector<8x4xf32>
    %c0_4 = arith.constant 0 : index
    %c0_5 = arith.constant 0 : index
    %c0_6 = arith.constant 0 : index
    %4 = vector.load %arg4[%c0_4, %c0_5, %c0_6] : memref<1x1x4xf32, #tpu.memory_space<vmem>>, vector<1x1x4xf32>
    %5 = vector.shape_cast %4 : vector<1x1x4xf32> to vector<1x4xf32>
    %6 = vector.broadcast %5 : vector<1x4xf32> to vector<8x4xf32>
    %7 = arith.addf %3, %6 : vector<8x4xf32>
    %c0_7 = arith.constant 0 : index
    %c0_8 = arith.constant 0 : index
    %c0_9 = arith.constant 0 : index
    %8 = vector.load %arg5[%c0_7, %c0_8, %c0_9] : memref<1x8x4xf32, #tpu.memory_space<vmem>>, vector<1x8x4xf32>
    %9 = vector.shape_cast %8 : vector<1x8x4xf32> to vector<8x4xf32>
    %10 = vector.shape_cast %7 : vector<8x4xf32> to vector<1x8x4xf32>
    tpu.vector_store %arg5[%c0_7, %c0_8, %c0_9], %10 {strides = array<i32>} : memref<1x8x4xf32, #tpu.memory_space<vmem>>, vector<1x8x4xf32>,
    return
  }
  func.func @transform_0(%arg0: i32, %arg1: i32) -> (i32, i32) {
    %c0_i32 = arith.constant 0 : i32
    return %arg1, %arg0 : i32, i32
  }
  func.func @transform_1(%arg0: i32, %arg1: i32) -> (i32, i32, i32) {
    %c0_i32 = arith.constant 0 : i32
    %c0_i32_0 = arith.constant 0 : i32
    %c0_i32_1 = arith.constant 0 : i32
    return %arg0, %c0_i32, %c0_i32_0 : i32, i32, i32
  }
  func.func @transform_2(%arg0: i32, %arg1: i32) -> (i32, i32, i32) {
    %c0_i32 = arith.constant 0 : i32
    %c0_i32_0 = arith.constant 0 : i32
    %c0_i32_1 = arith.constant 0 : i32
    return %arg0, %c0_i32, %c0_i32_0 : i32, i32, i32
  }
  func.func @transform_3(%arg0: i32, %arg1: i32) -> (i32, i32, i32) {
    %c0_i32 = arith.constant 0 : i32
    %c0_i32_0 = arith.constant 0 : i32
    return %arg0, %arg1, %c0_i32 : i32, i32, i32
  }
}

</mosaic_0001>

<llo_original>
// kernel: cell_to_entity.1
$region0: #{cell_to_entity.1}
  #allocation0 [shape = 'u32[]', space=smem, size = 0x4, offset = 0x4, fixed_abs, tag = 'smem constant byte address 0x4 - core index']
  #allocation1 [shape = 'u32[144,128]{1,0:T(1,128)}', space=vmem, size = 0x12000, scoped, tag = 'internal scratch']
  %s0 = inlined_call_operand.vmem [shape: f32[16,128], index: 0, kind: input, shape index: {}]
  %s1 = inlined_call_operand.vmem [shape: f32[1,128,4], index: 1, kind: input, shape index: {}]
  %s2 = inlined_call_operand.vmem [shape: f32[1,1,4], index: 2, kind: input, shape index: {}]
  %s3 = inlined_call_operand.vmem [shape: f32[1,16,4], index: 3, kind: output, shape index: {}]
  %s4 = sld [smem:[#allocation0]]
  $region45: #{cell_to_entity.1} parent=0
    _
  %s6 = ssub.s32 1, %s4
  %s7 = scalar_select 0, %s6, %s4
  loop: start=0, step=1, limit=4
  $region2: #{cell_to_entity.1} parent=0 // loop_pre_header
    _
  $region3: #{cell_to_entity.1} parent=0 // loop_header
    %s9 = sphi 0, %s13
    %p10 = scmp.ge.s32.totalorder %s9, 4
    %s16 = sphi 0, %s28
    %s17 = sphi 0, %s24
    %s18 = sphi 0, %s16
    %s19 = sphi 0, %s17
    %s20 = sphi 0, %s18
    %s21 = sphi 0, %s19
    %s33 = sphi 0, %s35
    %s36 = sphi 0, %s33
    %s37 = sphi 0, %s36
    %s53 = sphi 0, %s37
    %s59 = sphi 0, %s61
    %s62 = sphi 0, %s59
    %s63 = sphi 0, %s62
    %s79 = sphi 0, %s63
    %s85 = sphi 0, %s87
    %s88 = sphi 0, %s85
    %s89 = sphi 0, %s88
    %s105 = sphi 0, %s89
    %s113 = sphi 0, %s115
    %s116 = sphi 0, %s113
    %s117 = sphi 0, %s116
    %s133 = sphi 0, %s117
  $region4: #{cell_to_entity.1} parent=0 // loop_header_branch
    %12 = sbr.rel (%p10) target = $region8
  $region5: #{cell_to_entity.1} parent=0 // loop_body
    %s14 = ssub.s32 %s9, 1
    %s15 = ssub.s32 %s9, 2
    %s22 = sadd.s32 1, %s17
    %p23 = scmp.ge.s32.totalorder %s22, 2
    %s24 = scalar_select %p23, 0, %s22
    %s25 = sadd.s32 1, %s16
    %s26 = scalar_select %p23, %s25, %s16
    %p27 = scmp.ge.s32.totalorder %s26, 1
    %s28 = scalar_select %p27, 0, %s26
    %s29 = ssub.s32 %s17, %s24
    %s30 = ssub.s32 %s16, %s28
    %s31 = sor.u32 %s29, %s30
    %p32 = scmp.eq.s32.totalorder %s31, 0
    %s34 = sadd.s32 %s33, 1
    %s35 = scalar_select %p32, %s33, %s34
    %p38 = pneg %p32
    %p39 = scmp.eq.s32.totalorder %s9, 1
    %p40 = por %p38, %p39
    %p41 = scmp.ne.s32.totalorder %s33, %s36
    %p42 = scmp.eq.s32.totalorder %s9, 0
    %p43 = por %p41, %p42
    %p44 = scmp.ne.s32.totalorder %s33, %s36
    %p45 = scmp.eq.s32.totalorder %s14, 1
    %p46 = por %p44, %p45
    %p47 = scmp.ne.s32.totalorder %s36, %s37
    %p48 = scmp.eq.s32.totalorder %s14, 0
    %p49 = por %p47, %p48
    %p50 = scmp.ne.s32.totalorder %s36, %s37
    %p51 = scmp.eq.s32.totalorder %s15, 1
    %p52 = por %p50, %p51
    %p54 = scmp.ne.s32.totalorder %s37, %s53
    %p55 = scmp.eq.s32.totalorder %s15, 0
    %p56 = por %p54, %p55
    %s57 = ssub.s32 %s16, %s28
    %p58 = scmp.eq.s32.totalorder %s57, 0
    %s60 = sadd.s32 %s59, 1
    %s61 = scalar_select %p58, %s59, %s60
    %p64 = pneg %p58
    %p65 = scmp.eq.s32.totalorder %s9, 1
    %p66 = por %p64, %p65
    %p67 = scmp.ne.s32.totalorder %s59, %s62
    %p68 = scmp.eq.s32.totalorder %s9, 0
    %p69 = por %p67, %p68
    %p70 = scmp.ne.s32.totalorder %s59, %s62
    %p71 = scmp.eq.s32.totalorder %s14, 1
    %p72 = por %p70, %p71
    %p73 = scmp.ne.s32.totalorder %s62, %s63
    %p74 = scmp.eq.s32.totalorder %s14, 0
    %p75 = por %p73, %p74
    %p76 = scmp.ne.s32.totalorder %s62, %s63
    %p77 = scmp.eq.s32.totalorder %s15, 1
    %p78 = por %p76, %p77
    %p80 = scmp.ne.s32.totalorder %s63, %s79
    %p81 = scmp.eq.s32.totalorder %s15, 0
    %p82 = por %p80, %p81
    %s83 = ssub.s32 %s16, %s28
    %p84 = scmp.eq.s32.totalorder %s83, 0
    %s86 = sadd.s32 %s85, 1
    %s87 = scalar_select %p84, %s85, %s86
    %p90 = pneg %p84
    %p91 = scmp.eq.s32.totalorder %s9, 1
    %p92 = por %p90, %p91
    %p93 = scmp.ne.s32.totalorder %s85, %s88
    %p94 = scmp.eq.s32.totalorder %s9, 0
    %p95 = por %p93, %p94
    %p96 = scmp.ne.s32.totalorder %s85, %s88
    %p97 = scmp.eq.s32.totalorder %s14, 1
    %p98 = por %p96, %p97
    %p99 = scmp.ne.s32.totalorder %s88, %s89
    %p100 = scmp.eq.s32.totalorder %s14, 0
    %p101 = por %p99, %p100
    %p102 = scmp.ne.s32.totalorder %s88, %s89
    %p103 = scmp.eq.s32.totalorder %s15, 1
    %p104 = por %p102, %p103
    %p106 = scmp.ne.s32.totalorder %s89, %s105
    %p107 = scmp.eq.s32.totalorder %s15, 0
    %p108 = por %p106, %p107
    %s109 = ssub.s32 %s16, %s28
    %s110 = ssub.s32 %s17, %s24
    %s111 = sor.u32 %s109, %s110
    %p112 = scmp.eq.s32.totalorder %s111, 0
    %s114 = sadd.s32 %s113, 1
    %s115 = scalar_select %p112, %s113, %s114
    %p118 = pneg %p112
    %p119 = scmp.eq.s32.totalorder %s9, 1
    %p120 = por %p118, %p119
    %p121 = scmp.ne.s32.totalorder %s113, %s116
    %p122 = scmp.eq.s32.totalorder %s9, 0
    %p123 = por %p121, %p122
    %p124 = scmp.ne.s32.totalorder %s113, %s116
    %p125 = scmp.eq.s32.totalorder %s14, 1
    %p126 = por %p124, %p125
    %p127 = scmp.ne.s32.totalorder %s116, %s117
    %p128 = scmp.eq.s32.totalorder %s14, 0
    %p129 = por %p127, %p128
    %p130 = scmp.ne.s32.totalorder %s116, %s117
    %p131 = scmp.eq.s32.totalorder %s15, 1
    %p132 = por %p130, %p131
    %p134 = scmp.ne.s32.totalorder %s117, %s133
    %p135 = scmp.eq.s32.totalorder %s15, 0
    %p136 = por %p134, %p135
    %p137 = scmp.le.s32.totalorder 1, %s9
    %p138 = scmp.lt.s32.totalorder %s9, 3
    %p139 = pnand %p137, %p138
    %p140 = pneg %p139
    // Predicated region
    $region9: #{cell_to_entity.1} parent=5 // pred_check
      _
    $region10: #{cell_to_entity.1} parent=5 // pred_check_branch
      %142 = sbr.rel (%p139) target = $region12
    $region11: #{cell_to_entity.1} parent=5 // pred_region
      %s143 = ssub.s32 %s9, 1
      // Predicated region
      $region13: #{cell_to_entity.1} parent=11 // pred_check
        %p144 = pneg %p75
      $region14: #{cell_to_entity.1} parent=11 // pred_check_branch
        %146 = sbr.rel (%p144) target = $region16
      $region15: #{cell_to_entity.1} parent=11 // pred_region
        %p147 = scmp.lt.s32.totalorder %s18, 0
        %s148 = scalar_select %p147, %s18, 0
        %s149 = smul.addr %s148, 16
        %s150 = smul.addr %s149, 8
        %s151 = scalar_lea.vmem %s1, %s150
      $region16: #{cell_to_entity.1} parent=11 // pred_fallthru
        _
      // Predicated region
      $region17: #{cell_to_entity.1} parent=11 // pred_check
        %p152 = pneg %p101
      $region18: #{cell_to_entity.1} parent=11 // pred_check_branch
        %154 = sbr.rel (%p152) target = $region20
      $region19: #{cell_to_entity.1} parent=11 // pred_region
        %p155 = scmp.lt.s32.totalorder %s18, 0
        %s156 = scalar_select %p155, %s18, 0
        %s157 = scalar_lea.vmem %s2, %s156
      $region20: #{cell_to_entity.1} parent=11 // pred_fallthru
        _
    $region12: #{cell_to_entity.1} parent=5 // pred_fallthru
      _
    %p158 = scmp.lt.s32.totalorder %s9, 2
    // Predicated region
    $region21: #{cell_to_entity.1} parent=5 // pred_check
      %p159 = pneg %p158
    $region22: #{cell_to_entity.1} parent=5 // pred_check_branch
      %161 = sbr.rel (%p159) target = $region24
    $region23: #{cell_to_entity.1} parent=5 // pred_region
      // Predicated region
      $region25: #{cell_to_entity.1} parent=23 // pred_check
        %p162 = pneg %p43
      $region26: #{cell_to_entity.1} parent=23 // pred_check_branch
        %164 = sbr.rel (%p162) target = $region28
      $region27: #{cell_to_entity.1} parent=23 // pred_region
        %p165 = scmp.lt.s32.totalorder %s17, 1
        %s166 = scalar_select %p165, %s17, 1
        %p167 = scmp.lt.s32.totalorder %s16, 0
        %s168 = scalar_select %p167, %s16, 0
        %s169 = sadd.s32 %s168, %s166
        %s170 = smul.addr %s169, 8
        %s171 = scalar_lea.vmem %s0, %s170
      $region28: #{cell_to_entity.1} parent=23 // pred_fallthru
        _
    $region24: #{cell_to_entity.1} parent=5 // pred_fallthru
      _
    %p172 = scmp.le.s32.totalorder 1, %s9
    %p173 = scmp.lt.s32.totalorder %s9, 3
    %p174 = pnand %p172, %p173
    %p175 = pneg %p174
    // Predicated region
    $region29: #{cell_to_entity.1} parent=5 // pred_check
      _
    $region30: #{cell_to_entity.1} parent=5 // pred_check_branch
      %177 = sbr.rel (%p174) target = $region32
    $region31: #{cell_to_entity.1} parent=5 // pred_region
      %s178 = ssub.s32 %s9, 1
      %p179 = scmp.lt.s32.totalorder %s19, 1
      %s180 = scalar_select %p179, %s19, 1
      %p181 = scmp.lt.s32.totalorder %s18, 0
      %s182 = scalar_select %p181, %s18, 0
      %s183 = sadd.s32 %s182, %s180
      %s184 = smul.addr %s183, 8
      %s185 = scalar_lea.vmem %s0, %s184
      %p186 = pneg %p49
      %p187 = pneg %p46
      %p188 = scmp.lt.s32.totalorder %s18, 0
      %s189 = scalar_select %p188, %s18, 0
      %s190 = smul.addr %s189, 16
      %s191 = smul.addr %s190, 8
      %s192 = scalar_lea.vmem %s1, %s191
      %p193 = pneg %p75
      %p194 = pneg %p72
      %p195 = scmp.lt.s32.totalorder %s18, 0
      %s196 = scalar_select %p195, %s18, 0
      %s197 = scalar_lea.vmem %s2, %s196
      %p198 = pneg %p101
      %p199 = pneg %p98
      %p200 = pneg %p129
      %p201 = pneg %p126
      %p202 = scmp.lt.s32.totalorder %s18, 0
      %s203 = scalar_select %p202, %s18, 0
      %p204 = scmp.lt.s32.totalorder %s19, 1
      %s205 = scalar_select %p204, %s19, 1
      %s206 = smul.addr %s203, 2
      %s207 = sadd.s32 %s205, %s206
      %s208 = smul.addr %s207, 8
      %s209 = scalar_lea.vmem %s3, %s208
      %p210 = scmp.lt.s32.totalorder %s19, 1
      %s211 = scalar_select %p210, %s19, 1
      %p212 = scmp.lt.s32.totalorder %s18, 0
      %s213 = scalar_select %p212, %s18, 0
      %s214 = sadd.s32 %s213, %s211
      %s215 = smul.addr %s214, 8
      %s216 = scalar_lea.vmem %s0, %s215
      %p217 = scmp.lt.s32.totalorder %s18, 0
      %s218 = scalar_select %p217, %s18, 0
      %s219 = smul.addr %s218, 16
      %s220 = smul.addr %s219, 8
      %s221 = scalar_lea.vmem %s1, %s220
      %p222 = scmp.lt.s32.totalorder %s18, 0
      %s223 = scalar_select %p222, %s18, 0
      %s224 = scalar_lea.vmem %s2, %s223
      %p225 = scmp.lt.s32.totalorder %s18, 0
      %s226 = scalar_select %p225, %s18, 0
      %p227 = scmp.lt.s32.totalorder %s19, 1
      %s228 = scalar_select %p227, %s19, 1
      %s229 = smul.addr %s226, 2
      %s230 = sadd.s32 %s228, %s229
      %s231 = smul.addr %s230, 8
      %s232 = scalar_lea.vmem %s3, %s231
      %v233 = vld [vmem:[%s216] sm:$0xff]
      %v234 = vld [vmem:[%s221] sm:$0xff]
      %v235 = vld [vmem:[%s221 + $0x8] sm:$0xff]
      %v236 = vld [vmem:[%s221 + $0x10] sm:$0xff]
      %v237 = vld [vmem:[%s221 + $0x18] sm:$0xff]
      %v238 = vld [vmem:[%s221 + $0x20] sm:$0xff]
      %v239 = vld [vmem:[%s221 + $0x28] sm:$0xff]
      %v240 = vld [vmem:[%s221 + $0x30] sm:$0xff]
      %v241 = vld [vmem:[%s221 + $0x38] sm:$0xff]
      %v242 = vld [vmem:[%s221 + $0x40] sm:$0xff]
      %v243 = vld [vmem:[%s221 + $0x48] sm:$0xff]
      %v244 = vld [vmem:[%s221 + $0x50] sm:$0xff]
      %v245 = vld [vmem:[%s221 + $0x58] sm:$0xff]
      %v246 = vld [vmem:[%s221 + $0x60] sm:$0xff]
      %v247 = vld [vmem:[%s221 + $0x68] sm:$0xff]
      %v248 = vld [vmem:[%s221 + $0x70] sm:$0xff]
      %v249 = vld [vmem:[%s221 + $0x78] sm:$0xff]
      %v250 = vld [vmem:[%s224] sm:$0x1]
      %v252 = vlaneseq
      %v253 = vshrl.u32 %v252, 7
      %v254 = vsub.s32 0, %v253
      %v255 = vrot.slane %v250, %v254
      %257 = vmatprep.subr.mxu0 0.0
      %258 = vmatpush1.msra.mxu0 %v234
      %259 = vmatprep.subr.mxu0 0.0
      %260 = vmatpush1.msra.mxu0 %v235
      %261 = vmatprep.subr.mxu0 0.0
      %262 = vmatpush1.msra.mxu0 %v236
      %263 = vmatprep.subr.mxu0 0.0
      %264 = vmatpush1.msra.mxu0 %v237
      %265 = vmatprep.subr.mxu0 0.0
      %266 = vmatpush1.msra.mxu0 %v238
      %267 = vmatprep.subr.mxu0 0.0
      %268 = vmatpush1.msra.mxu0 %v239
      %269 = vmatprep.subr.mxu0 0.0
      %270 = vmatpush1.msra.mxu0 %v240
      %271 = vmatprep.subr.mxu0 0.0
      %272 = vmatpush1.msra.mxu0 %v241
      %273 = vmatprep.subr.mxu0 0.0
      %274 = vmatpush1.msra.mxu0 %v242
      %275 = vmatprep.subr.mxu0 0.0
      %276 = vmatpush1.msra.mxu0 %v243
      %277 = vmatprep.subr.mxu0 0.0
      %278 = vmatpush1.msra.mxu0 %v244
      %279 = vmatprep.subr.mxu0 0.0
      %280 = vmatpush1.msra.mxu0 %v245
      %281 = vmatprep.subr.mxu0 0.0
      %282 = vmatpush1.msra.mxu0 %v246
      %283 = vmatprep.subr.mxu0 0.0
      %284 = vmatpush1.msra.mxu0 %v247
      %285 = vmatprep.subr.mxu0 0.0
      %286 = vmatpush1.msra.mxu0 %v248
      %287 = vmatprep.subr.mxu0 0.0
      %288 = vmatpush1.msra.mxu0 %v249
      %289 = vmatprep.subr.mxu0 0.0
      %290 = vmatpush1.msra.mxu0 0.0
      %291 = vmatprep.subr.mxu0 0.0
      %292 = vmatpush1.msra.mxu0 0.0
      %293 = vmatprep.subr.mxu0 0.0
      %294 = vmatpush1.msra.mxu0 0.0
      %295 = vmatprep.subr.mxu0 0.0
      %296 = vmatpush1.msra.mxu0 0.0
      %297 = vmatprep.subr.mxu0 0.0
      %298 = vmatpush1.msra.mxu0 0.0
      %299 = vmatprep.subr.mxu0 0.0
      %300 = vmatpush1.msra.mxu0 0.0
      %301 = vmatprep.subr.mxu0 0.0
      %302 = vmatpush1.msra.mxu0 0.0
      %303 = vmatprep.subr.mxu0 0.0
      %304 = vmatpush1.msra.mxu0 0.0
      %305 = vmatprep.subr.mxu0 0.0
      %306 = vmatpush1.msra.mxu0 0.0
      %307 = vmatprep.subr.mxu0 0.0
      %308 = vmatpush1.msra.mxu0 0.0
      %309 = vmatprep.subr.mxu0 0.0
      %310 = vmatpush1.msra.mxu0 0.0
      %311 = vmatprep.subr.mxu0 0.0
      %312 = vmatpush1.msra.mxu0 0.0
      %313 = vmatprep.subr.mxu0 0.0
      %314 = vmatpush1.msra.mxu0 0.0
      %315 = vmatprep.subr.mxu0 0.0
      %316 = vmatpush1.msra.mxu0 0.0
      %317 = vmatprep.subr.mxu0 0.0
      %318 = vmatpush1.msra.mxu0 0.0
      %319 = vmatprep.subr.mxu0 0.0
      %320 = vmatpush1.msra.mxu0 0.0
      %321 = vmatprep.mubr.f32.mxu0 0.0
      %322 = vmatmul.mubr.f32.gmra.mrb[0].mxu0 %v233
      %v323 = vpop.f32.mrb[0].mxu0
      %v324 = vadd.f32 %v255, %v323
      %v325 = vpop.f32.mrb[0].mxu0
      %326 = vdwg.mxu0
      %vm327 = vcmask 31744
      %328 = vst.msk [vmem:[%s232] sm:$0xff] %vm327, %v324
      %p329 = scmp.lt.s32.totalorder %s18, 0
      %s330 = scalar_select %p329, %s18, 0
      %p331 = scmp.lt.s32.totalorder %s19, 1
      %s332 = scalar_select %p331, %s19, 1
      %s333 = smul.addr %s330, 2
      %s334 = sadd.s32 %s332, %s333
      %s335 = smul.addr %s334, 8
      %s336 = scalar_lea.vmem %s3, %s335
      // Predicated region
      $region33: #{cell_to_entity.1} parent=31 // pred_check
        %p337 = pneg %p126
      $region34: #{cell_to_entity.1} parent=31 // pred_check_branch
        %339 = sbr.rel (%p337) target = $region36
      $region35: #{cell_to_entity.1} parent=31 // pred_region
        _
      $region36: #{cell_to_entity.1} parent=31 // pred_fallthru
        _
    $region32: #{cell_to_entity.1} parent=5 // pred_fallthru
      _
    %p340 = scmp.le.s32.totalorder 2, %s9
    // Predicated region
    $region37: #{cell_to_entity.1} parent=5 // pred_check
      %p341 = pneg %p340
    $region38: #{cell_to_entity.1} parent=5 // pred_check_branch
      %343 = sbr.rel (%p341) target = $region40
    $region39: #{cell_to_entity.1} parent=5 // pred_region
      %s344 = ssub.s32 %s9, 2
      // Predicated region
      $region41: #{cell_to_entity.1} parent=39 // pred_check
        %p345 = pneg %p132
      $region42: #{cell_to_entity.1} parent=39 // pred_check_branch
        %347 = sbr.rel (%p345) target = $region44
      $region43: #{cell_to_entity.1} parent=39 // pred_region
        %p348 = scmp.lt.s32.totalorder %s20, 0
        %s349 = scalar_select %p348, %s20, 0
        %p350 = scmp.lt.s32.totalorder %s21, 1
        %s351 = scalar_select %p350, %s21, 1
        %s352 = smul.addr %s349, 2
        %s353 = sadd.s32 %s351, %s352
        %s354 = smul.addr %s353, 8
        %s355 = scalar_lea.vmem %s3, %s354
      $region44: #{cell_to_entity.1} parent=39 // pred_fallthru
        _
    $region40: #{cell_to_entity.1} parent=5 // pred_fallthru
      _
  $region6: #{cell_to_entity.1} parent=0 // loop_footer
    %s13 = sadd.s32 1, %s9
  $region7: #{cell_to_entity.1} parent=0 // loop_footer_branch
    %8 = sbr.rel target = $region3
  $region8: #{cell_to_entity.1} parent=0 // loop_exit
    _

</llo_original>
